<compile_context>
chip_gen: v7x
topology: tpu7x:2x2x1
jax: 0.10.0
libtpu: 0.0.40
codegen_flags: <defaults>
</compile_context>

<pallas_src>
import math
from functools import partial

import jax
import jax.numpy as jnp
from jax import lax
from jax.experimental import pallas as pl
from jax.experimental.pallas import tpu as pltpu


def make_positional_encoding(max_len: int, d_model: int) -> jnp.ndarray:
    """Matches PositionalEncoding.__init__ buffer `pe` (without the unsqueeze(1))."""
    position = jnp.arange(max_len, dtype=jnp.float32)[:, None]            # (L, 1)
    div_term = jnp.exp(
        jnp.arange(0, d_model, 2, dtype=jnp.float32) * (-math.log(10000.0) / d_model)
    )                                                                     # (D/2,)
    pe = jnp.zeros((max_len, d_model), dtype=jnp.float32)
    pe = pe.at[:, 0::2].set(jnp.sin(position * div_term))
    pe = pe.at[:, 1::2].set(jnp.cos(position * div_term))
    return pe


def _time_embed_kernel(ts_ref, pe_ref, w1_ref, b1_ref, w2_ref, b2_ref, o_ref, *, batch):
    """Fused: gather pe rows -> Linear -> SiLU -> Linear -> write (1, B, D)."""
    # Gather the B needed rows from the VMEM-resident pe table using the
    # scalar-prefetched timesteps (SMEM).  Dynamic sublane-offset slices.
    rows = [pe_ref[pl.ds(ts_ref[i], 1), :] for i in range(batch)]         # B x (1, D)
    x = jnp.concatenate(rows, axis=0)                                     # (B, D)

    # torch Linear is x @ W^T + b with W stored (out, in): contract dim 1 with dim 1,
    # so no wrapper-side transpose is needed (MXU takes either orientation).
    dn = (((1,), (1,)), ((), ()))
    h = lax.dot_general(x, w1_ref[...], dn,
                        preferred_element_type=jnp.float32) + b1_ref[...]
    h = h * jax.nn.sigmoid(h)                                             # SiLU (exp -> EUP)
    y = lax.dot_general(h, w2_ref[...], dn,
                        preferred_element_type=jnp.float32) + b2_ref[...]

    o_ref[0] = y.astype(o_ref.dtype)                                      # (1, B, D)


def timestep_embedder(timesteps, pe, w1, b1, w2, b2):
    """timesteps: (B,) int32.  Returns (1, B, D) f32, matching the torch module."""
    max_len, D = pe.shape
    B = timesteps.shape[0]

    b1_2d = b1.reshape(1, D)
    b2_2d = b2.reshape(1, D)

    grid_spec = pltpu.PrefetchScalarGridSpec(
        num_scalar_prefetch=1,          # timesteps -> SMEM, available to kernel + index_maps
        grid=(1,),
        in_specs=[
            pl.BlockSpec((max_len, D), lambda i, ts: (0, 0)),   # whole pe table in VMEM (~640 KB)
            pl.BlockSpec((D, D), lambda i, ts: (0, 0)),         # w1 (torch layout (out, in))
            pl.BlockSpec((1, D), lambda i, ts: (0, 0)),         # b1
            pl.BlockSpec((D, D), lambda i, ts: (0, 0)),         # w2
            pl.BlockSpec((1, D), lambda i, ts: (0, 0)),         # b2
        ],
        out_specs=pl.BlockSpec((1, B, D), lambda i, ts: (0, 0, 0)),
    )

    cost = pl.CostEstimate(
        flops=4 * B * D * D,                                          # two (B,D)x(D,D) matmuls
        transcendentals=B * D,                                        # exp in sigmoid
        bytes_accessed=(max_len * D + 2 * D * D + 2 * D + B * D) * 4 + B * 4,
    )

    return pl.pallas_call(
        partial(_time_embed_kernel, batch=B),
        out_shape=jax.ShapeDtypeStruct((1, B, D), jnp.float32),
        grid_spec=grid_spec,
        compiler_params=pltpu.CompilerParams(dimension_semantics=("arbitrary",)),
        cost_estimate=cost,
    )(timesteps.astype(jnp.int32), pe, w1, b1_2d, w2, b2_2d)


def reference(timesteps, pe, w1, b1, w2, b2):
    """Pure-JAX reference mirroring the torch forward."""
    x = pe[timesteps][:, None, :]                                         # (B, 1, D)
    h = x @ w1.T + b1
    h = h * jax.nn.sigmoid(h)
    y = h @ w2.T + b2
    return jnp.transpose(y, (1, 0, 2))                                    # (1, B, D)


if __name__ == "__main__":
    latent_dim = 32
    max_len = 5000
    B = 4

    key = jax.random.PRNGKey(0)
    k1, k2, k3, k4, k5 = jax.random.split(key, 5)

    # Deterministic synthetic parameters (torch Linear shapes: W (out,in), b (out,))
    w1 = jax.random.normal(k1, (latent_dim, latent_dim), jnp.float32) * 0.1
    b1 = jax.random.normal(k2, (latent_dim,), jnp.float32) * 0.1
    w2 = jax.random.normal(k3, (latent_dim, latent_dim), jnp.float32) * 0.1
    b2 = jax.random.normal(k4, (latent_dim,), jnp.float32) * 0.1

    pe = make_positional_encoding(max_len, latent_dim)
    timesteps = jax.random.randint(k5, (B,), 0, 1000, dtype=jnp.int32)

    out = timestep_embedder(timesteps, pe, w1, b1, w2, b2)
    out = jax.block_until_ready(out)

    ref = reference(timesteps, pe, w1, b1, w2, b2)
    assert out.shape == (1, B, latent_dim), out.shape
    assert jnp.allclose(out, ref, atol=1e-5, rtol=1e-5), float(jnp.abs(out - ref).max())

    print("KERNEL_OK")
</pallas_src>

<mosaic_0001>
module attributes {stable_mosaic.version = 11 : i64} {
  func.func @_time_embed_kernel(%arg0: i32, %arg1: memref<4xi32, #tpu.memory_space<smem>>, %arg2: memref<5000x32xf32, #tpu.memory_space<vmem>>, %arg3: memref<32x32xf32, #tpu.memory_space<vmem>>, %arg4: memref<1x32xf32, #tpu.memory_space<vmem>>, %arg5: memref<32x32xf32, #tpu.memory_space<vmem>>, %arg6: memref<1x32xf32, #tpu.memory_space<vmem>>, %arg7: memref<1x4x32xf32, #tpu.memory_space<vmem>>) attributes {dimension_semantics = [#tpu.dimension_semantics<arbitrary>], iteration_bounds = array<i64: 1>, scalar_prefetch = 1 : i64, scratch_operands = 0 : i64, tpu.core_type = #tpu.core_type<tc>, window_params = [{pipeline_mode = #tpu.pipeline_mode<synchronous>, transform_indices = @transform_0, window_bounds = array<i64: 5000, 32>}, {pipeline_mode = #tpu.pipeline_mode<synchronous>, transform_indices = @transform_1, window_bounds = array<i64: 32, 32>}, {pipeline_mode = #tpu.pipeline_mode<synchronous>, transform_indices = @transform_2, window_bounds = array<i64: 1, 32>}, {pipeline_mode = #tpu.pipeline_mode<synchronous>, transform_indices = @transform_3, window_bounds = array<i64: 32, 32>}, {pipeline_mode = #tpu.pipeline_mode<synchronous>, transform_indices = @transform_4, window_bounds = array<i64: 1, 32>}, {pipeline_mode = #tpu.pipeline_mode<synchronous>, transform_indices = @transform_5, window_bounds = array<i64: 1, 4, 32>}]} {
    %c0 = arith.constant 0 : index
    %0 = memref.load %arg1[%c0] : memref<4xi32, #tpu.memory_space<smem>>
    %1 = arith.index_cast %0 : i32 to index
    %c0_0 = arith.constant 0 : index
    %2 = vector.load %arg2[%1, %c0_0] : memref<5000x32xf32, #tpu.memory_space<vmem>>, vector<1x32xf32>
    %c1 = arith.constant 1 : index
    %3 = memref.load %arg1[%c1] : memref<4xi32, #tpu.memory_space<smem>>
    %4 = arith.index_cast %3 : i32 to index
    %c0_1 = arith.constant 0 : index
    %5 = vector.load %arg2[%4, %c0_1] : memref<5000x32xf32, #tpu.memory_space<vmem>>, vector<1x32xf32>
    %c2 = arith.constant 2 : index
    %6 = memref.load %arg1[%c2] : memref<4xi32, #tpu.memory_space<smem>>
    %7 = arith.index_cast %6 : i32 to index
    %c0_2 = arith.constant 0 : index
    %8 = vector.load %arg2[%7, %c0_2] : memref<5000x32xf32, #tpu.memory_space<vmem>>, vector<1x32xf32>
    %c3 = arith.constant 3 : index
    %9 = memref.load %arg1[%c3] : memref<4xi32, #tpu.memory_space<smem>>
    %10 = arith.index_cast %9 : i32 to index
    %c0_3 = arith.constant 0 : index
    %11 = vector.load %arg2[%10, %c0_3] : memref<5000x32xf32, #tpu.memory_space<vmem>>, vector<1x32xf32>
    %12 = tpu.concatenate %2, %5, %8, %11 in 0 : vector<1x32xf32>, vector<1x32xf32>, vector<1x32xf32>, vector<1x32xf32> -> vector<4x32xf32>
    %c0_4 = arith.constant 0 : index
    %c0_5 = arith.constant 0 : index
    %13 = vector.load %arg3[%c0_4, %c0_5] : memref<32x32xf32, #tpu.memory_space<vmem>>, vector<32x32xf32>
    %cst = arith.constant dense<0.000000e+00> : vector<4x32xf32>
    %14 = tpu.matmul %12, %13, %cst {dimension_numbers = #tpu.dot_dimension_numbers<[1], [1], [0], [0], [0, 0, 1, 0], [], []>} : vector<4x32xf32>, vector<32x32xf32>, vector<4x32xf32> -> vector<4x32xf32>
    %c0_6 = arith.constant 0 : index
    %c0_7 = arith.constant 0 : index
    %15 = vector.load %arg4[%c0_6, %c0_7] : memref<1x32xf32, #tpu.memory_space<vmem>>, vector<1x32xf32>
    %16 = vector.broadcast %15 : vector<1x32xf32> to vector<4x32xf32>
    %17 = arith.addf %14, %16 : vector<4x32xf32>
    %18 = arith.negf %17 : vector<4x32xf32>
    %19 = math.exp %18 : vector<4x32xf32>
    %cst_8 = arith.constant 1.000000e+00 : f32
    %20 = vector.broadcast %cst_8 : f32 to vector<4x32xf32>
    %21 = arith.addf %20, %19 : vector<4x32xf32>
    %22 = arith.divf %20, %21 : vector<4x32xf32>
    %23 = arith.mulf %17, %22 : vector<4x32xf32>
    %c0_9 = arith.constant 0 : index
    %c0_10 = arith.constant 0 : index
    %24 = vector.load %arg5[%c0_9, %c0_10] : memref<32x32xf32, #tpu.memory_space<vmem>>, vector<32x32xf32>
    %cst_11 = arith.constant dense<0.000000e+00> : vector<4x32xf32>
    %25 = tpu.matmul %23, %24, %cst_11 {dimension_numbers = #tpu.dot_dimension_numbers<[1], [1], [0], [0], [0, 0, 1, 0], [], []>} : vector<4x32xf32>, vector<32x32xf32>, vector<4x32xf32> -> vector<4x32xf32>
    %c0_12 = arith.constant 0 : index
    %c0_13 = arith.constant 0 : index
    %26 = vector.load %arg6[%c0_12, %c0_13] : memref<1x32xf32, #tpu.memory_space<vmem>>, vector<1x32xf32>
    %27 = vector.broadcast %26 : vector<1x32xf32> to vector<4x32xf32>
    %28 = arith.addf %25, %27 : vector<4x32xf32>
    %c0_14 = arith.constant 0 : index
    %c0_15 = arith.constant 0 : index
    %c0_16 = arith.constant 0 : index
    %29 = vector.load %arg7[%c0_14, %c0_15, %c0_16] : memref<1x4x32xf32, #tpu.memory_space<vmem>>, vector<1x4x32xf32>
    %30 = vector.shape_cast %29 : vector<1x4x32xf32> to vector<4x32xf32>
    %31 = vector.shape_cast %28 : vector<4x32xf32> to vector<1x4x32xf32>
    tpu.vector_store %arg7[%c0_14, %c0_15, %c0_16], %31 {strides = array<i32>} : memref<1x4x32xf32, #tpu.memory_space<vmem>>, vector<1x4x32xf32>,
    return
  }
  func.func @transform_0(%arg0: i32, %arg1: memref<4xi32, #tpu.memory_space<smem>>) -> (i32, i32) {
    %c0_i32 = arith.constant 0 : i32
    %c0_i32_0 = arith.constant 0 : i32
    %c0_i32_1 = arith.constant 0 : i32
    return %c0_i32, %c0_i32_0 : i32, i32
  }
  func.func @transform_1(%arg0: i32, %arg1: memref<4xi32, #tpu.memory_space<smem>>) -> (i32, i32) {
    %c0_i32 = arith.constant 0 : i32
    %c0_i32_0 = arith.constant 0 : i32
    %c0_i32_1 = arith.constant 0 : i32
    return %c0_i32, %c0_i32_0 : i32, i32
  }
  func.func @transform_2(%arg0: i32, %arg1: memref<4xi32, #tpu.memory_space<smem>>) -> (i32, i32) {
    %c0_i32 = arith.constant 0 : i32
    %c0_i32_0 = arith.constant 0 : i32
    %c0_i32_1 = arith.constant 0 : i32
    return %c0_i32, %c0_i32_0 : i32, i32
  }
  func.func @transform_3(%arg0: i32, %arg1: memref<4xi32, #tpu.memory_space<smem>>) -> (i32, i32) {
    %c0_i32 = arith.constant 0 : i32
    %c0_i32_0 = arith.constant 0 : i32
    %c0_i32_1 = arith.constant 0 : i32
    return %c0_i32, %c0_i32_0 : i32, i32
  }
  func.func @transform_4(%arg0: i32, %arg1: memref<4xi32, #tpu.memory_space<smem>>) -> (i32, i32) {
    %c0_i32 = arith.constant 0 : i32
    %c0_i32_0 = arith.constant 0 : i32
    %c0_i32_1 = arith.constant 0 : i32
    return %c0_i32, %c0_i32_0 : i32, i32
  }
  func.func @transform_5(%arg0: i32, %arg1: memref<4xi32, #tpu.memory_space<smem>>) -> (i32, i32, i32) {
    %c0_i32 = arith.constant 0 : i32
    %c0_i32_0 = arith.constant 0 : i32
    %c0_i32_1 = arith.constant 0 : i32
    %c0_i32_2 = arith.constant 0 : i32
    return %c0_i32, %c0_i32_0, %c0_i32_1 : i32, i32, i32
  }
}

</mosaic_0001>

<llo_original>
// kernel: tpu_custom_call.1
$region0: #{tpu_custom_call.1}
  #allocation0 [shape = 'u32[]', space=smem, size = 0x4, offset = 0x4, fixed_abs, tag = 'smem constant byte address 0x4 - core index']
  #allocation1 [shape = 'u32[144,128]{1,0:T(1,128)}', space=vmem, size = 0x12000, scoped, tag = 'internal scratch']
  #allocation2 [shape = 's32[1]{0}', space=sflag, size = 0x4, scoped, tag = 'scoped memory for tpu_custom_call.1']
  #allocation3 [shape = 'u8[512]{0}', space=smem, size = 0x200, scoped, tag = 'prefetched SMEM operand 0']
  %s0 = inlined_call_operand.vmem [shape: s32[4], index: 0, kind: input, shape index: {}]
  %s1 = inlined_call_operand.vmem [shape: f32[5000,32], index: 1, kind: input, shape index: {}]
  %s2 = inlined_call_operand.vmem [shape: f32[32,32], index: 2, kind: input, shape index: {}]
  %s3 = inlined_call_operand.vmem [shape: f32[1,32], index: 3, kind: input, shape index: {}]
  %s4 = inlined_call_operand.vmem [shape: f32[32,32], index: 4, kind: input, shape index: {}]
  %s5 = inlined_call_operand.vmem [shape: f32[1,32], index: 5, kind: input, shape index: {}]
  %s6 = inlined_call_operand.hbm [shape: f32[1,4,32], index: 6, kind: output, shape index: {}]
  %s7 = sld [smem:[#allocation0]]
  $region30: #{tpu_custom_call.1} parent=0
    _
  %s9 = ssub.s32 1, %s7
  %s10 = scalar_select 0, %s9, %s7
  %s11 = sshll.u32 %s0, 4
  %s12 = int_to_ptr.vmem [resolvable:$true] %s11
  %14 = dma.vmem_to_smem %s12, 16, [#allocation3], [#allocation2]
  %15 = dma.done [#allocation2], 16
  %16 = sfence
  $region1: #{tpu_custom_call.1} parent=0
    #allocation4 [shape = 'u8[2048]{0}', space=vmem, size = 0x800, scoped, tag = 'output window, operand 0, single buffered']
    #allocation5 [shape = 's32[1]{0}', space=sflag, size = 0x4, scoped, tag = 'scoped memory for tpu_custom_call.1']
    %17 = vsyncpa [#allocation5], 0
    // Predicated region
    $region2: #{tpu_custom_call.1} parent=1 // pred_check
      _
    $region3: #{tpu_custom_call.1} parent=1 // pred_check_branch
      %19 = sbr.rel (0) target = $region5
    $region4: #{tpu_custom_call.1} parent=1 // pred_region
      _
    $region5: #{tpu_custom_call.1} parent=1 // pred_fallthru
      _
    // Predicated region
    $region6: #{tpu_custom_call.1} parent=1 // pred_check
      _
    $region7: #{tpu_custom_call.1} parent=1 // pred_check_branch
      %21 = sbr.rel (0) target = $region9
    $region8: #{tpu_custom_call.1} parent=1 // pred_region
      _
    $region9: #{tpu_custom_call.1} parent=1 // pred_fallthru
      _
    // Predicated region
    $region10: #{tpu_custom_call.1} parent=1 // pred_check
      _
    $region11: #{tpu_custom_call.1} parent=1 // pred_check_branch
      %23 = sbr.rel (0) target = $region13
    $region12: #{tpu_custom_call.1} parent=1 // pred_region
      _
    $region13: #{tpu_custom_call.1} parent=1 // pred_fallthru
      _
    // Predicated region
    $region14: #{tpu_custom_call.1} parent=1 // pred_check
      _
    $region15: #{tpu_custom_call.1} parent=1 // pred_check_branch
      %25 = sbr.rel (0) target = $region17
    $region16: #{tpu_custom_call.1} parent=1 // pred_region
      _
    $region17: #{tpu_custom_call.1} parent=1 // pred_fallthru
      _
    // Predicated region
    $region18: #{tpu_custom_call.1} parent=1 // pred_check
      _
    $region19: #{tpu_custom_call.1} parent=1 // pred_check_branch
      %27 = sbr.rel (0) target = $region21
    $region20: #{tpu_custom_call.1} parent=1 // pred_region
      _
    $region21: #{tpu_custom_call.1} parent=1 // pred_fallthru
      _
    %s28 = sld [smem:[#allocation3]]
    %s29 = scalar_lea.vmem %s1, %s28
    %v30 = vld [vmem:[%s29] sm:$0x1]
    %s31 = sld [smem:[#allocation3 + $0x1]]
    %s32 = scalar_lea.vmem %s1, %s31
    %v33 = vld [vmem:[%s32] sm:$0x1]
    %s34 = sld [smem:[#allocation3 + $0x2]]
    %s35 = scalar_lea.vmem %s1, %s34
    %v36 = vld [vmem:[%s35] sm:$0x1]
    %s37 = sld [smem:[#allocation3 + $0x3]]
    %s38 = scalar_lea.vmem %s1, %s37
    %v39 = vld [vmem:[%s38] sm:$0x1]
    %v41 = vrot.slane %v33, 7
    %v44 = vrot.slane %v36, 6
    %v47 = vrot.slane %v39, 5
    %vm49 = vcmask 1040384
    %v50 = vsel %vm49, %v30, %v41
    %vm51 = vcmask 1041408
    %v52 = vsel %vm51, %v50, %v44
    %vm53 = vcmask 1042432
    %v54 = vsel %vm53, %v52, %v47
    %v55 = vld [vmem:[%s2] sm:$0xff]
    %v56 = vld [vmem:[%s2 + $0x8] sm:$0xff]
    %v57 = vld [vmem:[%s2 + $0x10] sm:$0xff]
    %v58 = vld [vmem:[%s2 + $0x18] sm:$0xff]
    %v59 = vld [vmem:[%s3] sm:$0x1]
    %v61 = vlaneseq
    %v62 = vshrl.u32 %v61, 7
    %v63 = vsub.s32 0, %v62
    %v64 = vrot.slane %v59, %v63
    %vm66 = vcmask 261120
    %v68 = vsel %vm66, %v54, 0
    %v71 = vsel %vm66, %v55, 0
    %v74 = vsel %vm66, %v56, 0
    %v77 = vsel %vm66, %v57, 0
    %v80 = vsel %vm66, %v58, 0
    %82 = vmatprep.subr.mxu0 0.0
    %83 = vmatpush1.xpose.msra.mxu0 %v71
    %84 = vmatprep.subr.mxu0 0.0
    %85 = vmatpush1.xpose.msra.mxu0 %v74
    %86 = vmatprep.subr.mxu0 0.0
    %87 = vmatpush1.xpose.msra.mxu0 %v77
    %88 = vmatprep.subr.mxu0 0.0
    %89 = vmatpush1.xpose.msra.mxu0 %v80
    %90 = vmatprep.subr.mxu0 0.0
    %91 = vmatpush1.xpose.msra.mxu0 0.0
    %92 = vmatprep.subr.mxu0 0.0
    %93 = vmatpush1.xpose.msra.mxu0 0.0
    %94 = vmatprep.subr.mxu0 0.0
    %95 = vmatpush1.xpose.msra.mxu0 0.0
    %96 = vmatprep.subr.mxu0 0.0
    %97 = vmatpush1.xpose.msra.mxu0 0.0
    %98 = vmatprep.subr.mxu0 0.0
    %99 = vmatpush1.xpose.msra.mxu0 0.0
    %100 = vmatprep.subr.mxu0 0.0
    %101 = vmatpush1.xpose.msra.mxu0 0.0
    %102 = vmatprep.subr.mxu0 0.0
    %103 = vmatpush1.xpose.msra.mxu0 0.0
    %104 = vmatprep.subr.mxu0 0.0
    %105 = vmatpush1.xpose.msra.mxu0 0.0
    %106 = vmatprep.subr.mxu0 0.0
    %107 = vmatpush1.xpose.msra.mxu0 0.0
    %108 = vmatprep.subr.mxu0 0.0
    %109 = vmatpush1.xpose.msra.mxu0 0.0
    %110 = vmatprep.subr.mxu0 0.0
    %111 = vmatpush1.xpose.msra.mxu0 0.0
    %112 = vmatprep.subr.mxu0 0.0
    %113 = vmatpush1.xpose.msra.mxu0 0.0
    %114 = vmatprep.subr.mxu0 0.0
    %115 = vmatpush1.xpose.msra.mxu0 0.0
    %116 = vmatprep.subr.mxu0 0.0
    %117 = vmatpush1.xpose.msra.mxu0 0.0
    %118 = vmatprep.subr.mxu0 0.0
    %119 = vmatpush1.xpose.msra.mxu0 0.0
    %120 = vmatprep.subr.mxu0 0.0
    %121 = vmatpush1.xpose.msra.mxu0 0.0
    %122 = vmatprep.subr.mxu0 0.0
    %123 = vmatpush1.xpose.msra.mxu0 0.0
    %124 = vmatprep.subr.mxu0 0.0
    %125 = vmatpush1.xpose.msra.mxu0 0.0
    %126 = vmatprep.subr.mxu0 0.0
    %127 = vmatpush1.xpose.msra.mxu0 0.0
    %128 = vmatprep.subr.mxu0 0.0
    %129 = vmatpush1.xpose.msra.mxu0 0.0
    %130 = vmatprep.subr.mxu0 0.0
    %131 = vmatpush1.xpose.msra.mxu0 0.0
    %132 = vmatprep.subr.mxu0 0.0
    %133 = vmatpush1.xpose.msra.mxu0 0.0
    %134 = vmatprep.subr.mxu0 0.0
    %135 = vmatpush1.xpose.msra.mxu0 0.0
    %136 = vmatprep.subr.mxu0 0.0
    %137 = vmatpush1.xpose.msra.mxu0 0.0
    %138 = vmatprep.subr.mxu0 0.0
    %139 = vmatpush1.xpose.msra.mxu0 0.0
    %140 = vmatprep.subr.mxu0 0.0
    %141 = vmatpush1.xpose.msra.mxu0 0.0
    %142 = vmatprep.subr.mxu0 0.0
    %143 = vmatpush1.xpose.msra.mxu0 0.0
    %144 = vmatprep.subr.mxu0 0.0
    %145 = vmatpush1.xpose.msra.mxu0 0.0
    %146 = vmatprep.mubr.f32.mxu0 0.0
    %147 = vmatmul.mubr.f32.gmra.mrb[0].mxu0 %v68
    %v148 = vpop.f32.mrb[0].mxu0
    %v149 = vadd.f32 %v64, %v148
    %v150 = vpop.f32.mrb[0].mxu0
    %151 = vdwg.mxu0
    %v152 = vxor.u32 %v149, 2147483648
    %v153 = vmul.f32 %v152, 1.442695
    %v154 = vpow.pop %v153
    %v155 = vadd.f32 %v154, 1.0
    %v156 = vrcp.pop %v155
    %v157 = vmul.f32 1.0, %v156
    %v158 = vmul.f32 %v149, %v157
    %v159 = vld [vmem:[%s4] sm:$0xff]
    %v160 = vld [vmem:[%s4 + $0x8] sm:$0xff]
    %v161 = vld [vmem:[%s4 + $0x10] sm:$0xff]
    %v162 = vld [vmem:[%s4 + $0x18] sm:$0xff]
    %v163 = vld [vmem:[%s5] sm:$0x1]
    %v165 = vlaneseq
    %v166 = vshrl.u32 %v165, 7
    %v167 = vsub.s32 0, %v166
    %v168 = vrot.slane %v163, %v167
    %v171 = vsel %vm66, %v158, 0
    %v174 = vsel %vm66, %v159, 0
    %v177 = vsel %vm66, %v160, 0
    %v180 = vsel %vm66, %v161, 0
    %v183 = vsel %vm66, %v162, 0
    %185 = vmatprep.subr.mxu0 0.0
    %186 = vmatpush1.xpose.msra.mxu0 %v174
    %187 = vmatprep.subr.mxu0 0.0
    %188 = vmatpush1.xpose.msra.mxu0 %v177
    %189 = vmatprep.subr.mxu0 0.0
    %190 = vmatpush1.xpose.msra.mxu0 %v180
    %191 = vmatprep.subr.mxu0 0.0
    %192 = vmatpush1.xpose.msra.mxu0 %v183
    %193 = vmatprep.subr.mxu0 0.0
    %194 = vmatpush1.xpose.msra.mxu0 0.0
    %195 = vmatprep.subr.mxu0 0.0
    %196 = vmatpush1.xpose.msra.mxu0 0.0
    %197 = vmatprep.subr.mxu0 0.0
    %198 = vmatpush1.xpose.msra.mxu0 0.0
    %199 = vmatprep.subr.mxu0 0.0
    %200 = vmatpush1.xpose.msra.mxu0 0.0
    %201 = vmatprep.subr.mxu0 0.0
    %202 = vmatpush1.xpose.msra.mxu0 0.0
    %203 = vmatprep.subr.mxu0 0.0
    %204 = vmatpush1.xpose.msra.mxu0 0.0
    %205 = vmatprep.subr.mxu0 0.0
    %206 = vmatpush1.xpose.msra.mxu0 0.0
    %207 = vmatprep.subr.mxu0 0.0
    %208 = vmatpush1.xpose.msra.mxu0 0.0
    %209 = vmatprep.subr.mxu0 0.0
    %210 = vmatpush1.xpose.msra.mxu0 0.0
    %211 = vmatprep.subr.mxu0 0.0
    %212 = vmatpush1.xpose.msra.mxu0 0.0
    %213 = vmatprep.subr.mxu0 0.0
    %214 = vmatpush1.xpose.msra.mxu0 0.0
    %215 = vmatprep.subr.mxu0 0.0
    %216 = vmatpush1.xpose.msra.mxu0 0.0
    %217 = vmatprep.subr.mxu0 0.0
    %218 = vmatpush1.xpose.msra.mxu0 0.0
    %219 = vmatprep.subr.mxu0 0.0
    %220 = vmatpush1.xpose.msra.mxu0 0.0
    %221 = vmatprep.subr.mxu0 0.0
    %222 = vmatpush1.xpose.msra.mxu0 0.0
    %223 = vmatprep.subr.mxu0 0.0
    %224 = vmatpush1.xpose.msra.mxu0 0.0
    %225 = vmatprep.subr.mxu0 0.0
    %226 = vmatpush1.xpose.msra.mxu0 0.0
    %227 = vmatprep.subr.mxu0 0.0
    %228 = vmatpush1.xpose.msra.mxu0 0.0
    %229 = vmatprep.subr.mxu0 0.0
    %230 = vmatpush1.xpose.msra.mxu0 0.0
    %231 = vmatprep.subr.mxu0 0.0
    %232 = vmatpush1.xpose.msra.mxu0 0.0
    %233 = vmatprep.subr.mxu0 0.0
    %234 = vmatpush1.xpose.msra.mxu0 0.0
    %235 = vmatprep.subr.mxu0 0.0
    %236 = vmatpush1.xpose.msra.mxu0 0.0
    %237 = vmatprep.subr.mxu0 0.0
    %238 = vmatpush1.xpose.msra.mxu0 0.0
    %239 = vmatprep.subr.mxu0 0.0
    %240 = vmatpush1.xpose.msra.mxu0 0.0
    %241 = vmatprep.subr.mxu0 0.0
    %242 = vmatpush1.xpose.msra.mxu0 0.0
    %243 = vmatprep.subr.mxu0 0.0
    %244 = vmatpush1.xpose.msra.mxu0 0.0
    %245 = vmatprep.subr.mxu0 0.0
    %246 = vmatpush1.xpose.msra.mxu0 0.0
    %247 = vmatprep.subr.mxu0 0.0
    %248 = vmatpush1.xpose.msra.mxu0 0.0
    %249 = vmatprep.mubr.f32.mxu0 0.0
    %250 = vmatmul.mubr.f32.gmra.mrb[0].mxu0 %v171
    %v251 = vpop.f32.mrb[0].mxu0
    %v252 = vadd.f32 %v168, %v251
    %v253 = vpop.f32.mrb[0].mxu0
    %254 = vdwg.mxu0
    %vm255 = vcmask 257024
    %256 = vst.msk [vmem:[#allocation4] sm:$0xf] %vm255, %v252
    // Predicated region
    $region22: #{tpu_custom_call.1} parent=1 // pred_check
      _
    $region23: #{tpu_custom_call.1} parent=1 // pred_check_branch
      %258 = sbr.rel (0) target = $region25
    $region24: #{tpu_custom_call.1} parent=1 // pred_region
      %s260 = ssub.s32 64, 64
      %261 = vsyncadd [#allocation5], %s260
      %s263 = sshll.u32 [#allocation4], 4
      %s264 = int_to_ptr.vmem [resolvable:$true] %s263
      %266 = dma.vmem_to_hbm [thread:$0]  %s264, 64, %s6, [#allocation5]
    $region25: #{tpu_custom_call.1} parent=1 // pred_fallthru
      _
    // Predicated region
    $region26: #{tpu_custom_call.1} parent=1 // pred_check
      _
    $region27: #{tpu_custom_call.1} parent=1 // pred_check_branch
      %268 = sbr.rel (0) target = $region29
    $region28: #{tpu_custom_call.1} parent=1 // pred_region
      %269 = dma.done [#allocation5], 64
    $region29: #{tpu_custom_call.1} parent=1 // pred_fallthru
      _
    %270 = vsyncpa [#allocation5], 1

</llo_original>
